<compile_context>
chip_gen: v5e
topology: v5e:2x2
jax: 0.10.0
libtpu: 0.0.40
codegen_flags: <defaults>
</compile_context>

<pallas_src>
import functools
import math

import jax
import jax.numpy as jnp
from jax import lax
from jax.experimental import pallas as pl
from jax.experimental.pallas import tpu as pltpu

_INV_SQRT2 = 0.7071067811865476
_SQRT_2_OVER_PI = 0.7978845608028654


def _round_up(x, m):
    return (x + m - 1) // m * m


def _cdiv(a, b):
    return -(-a // b)


def _vmem_capacity_bytes():
    try:
        return int(pltpu.get_tpu_info().vmem_capacity_bytes)
    except Exception:
        return 64 << 20  # conservative (v7x-sized) fallback if the query fails


def _pick_h_chunk(hp, target=512):
    """Largest multiple of 128 <= target that divides hp (hp itself if small)."""
    if hp <= target:
        return hp
    for c in range(target, 127, -128):
        if hp % c == 0:
            return c
    return hp


def _gelu(h, approximate):
    if approximate:
        # tanh-approximate GELU: tanh runs on the EUP (its own VLIW slot).
        return 0.5 * h * (1.0 + jnp.tanh(
            jnp.float32(_SQRT_2_OVER_PI) * (h + jnp.float32(0.044715) * h * h * h)))
    # Exact erf GELU (matches torch.nn.GELU default).
    return 0.5 * h * (1.0 + lax.erf(h * jnp.float32(_INV_SQRT2)))


# --------------------------------------------------------------------------
# Path A: weights fully resident in VMEM (single-buffered), 1-D grid over rows,
# H chunked *inside* the kernel so MXU / VPU+EUP work interleaves.
# --------------------------------------------------------------------------
def _mlp_resident_kernel(x_ref, w1_ref, b1_ref, w2_ref, b2_ref, o_ref, *,
                         h_chunk, n_chunks, approximate):
    # x_ref: (tm, D) in dtype   w1_ref: (D, Hp) bf16   b1_ref: (1, Hp) f32
    # w2_ref: (Hp, D) bf16      b2_ref: (1, D)  f32    o_ref:  (tm, D) out dtype
    x = x_ref[...].astype(w1_ref.dtype)
    acc = jnp.zeros((x.shape[0], o_ref.shape[1]), jnp.float32)
    for c in range(n_chunks):                       # static unroll over H chunks
        lo = c * h_chunk
        h = jnp.dot(x, w1_ref[:, lo:lo + h_chunk],
                    preferred_element_type=jnp.float32) + b1_ref[:, lo:lo + h_chunk]
        h = _gelu(h, approximate)
        acc = acc + jnp.dot(h.astype(w2_ref.dtype), w2_ref[lo:lo + h_chunk, :],
                            preferred_element_type=jnp.float32)
    o_ref[...] = (acc + b2_ref[...]).astype(o_ref.dtype)


# --------------------------------------------------------------------------
# Path B: very large mlp_dim (e.g. v7x).  Stream (D,tH)/(tH,D) weight tiles
# over an inner "arbitrary" H axis; accumulate into an f32 VMEM scratch.
# --------------------------------------------------------------------------
def _mlp_stream_kernel(x_ref, w1_ref, b1_ref, w2_ref, b2_ref, o_ref, acc_ref, *,
                       approximate):
    hstep = pl.program_id(1)

    @pl.when(hstep == 0)
    def _():
        acc_ref[...] = jnp.zeros_like(acc_ref)

    x = x_ref[...].astype(w1_ref.dtype)
    h = jnp.dot(x, w1_ref[...], preferred_element_type=jnp.float32) + b1_ref[...]
    h = _gelu(h, approximate)
    acc_ref[...] += jnp.dot(h.astype(w2_ref.dtype), w2_ref[...],
                            preferred_element_type=jnp.float32)

    @pl.when(hstep == pl.num_programs(1) - 1)
    def _():
        o_ref[...] = (acc_ref[...] + b2_ref[...]).astype(o_ref.dtype)


# --------------------------------------------------------------------------
# One-time parameter preparation (hoisted out of the per-call path).
# --------------------------------------------------------------------------
def prepare_mlp_params(w1, b1, w2, b2, compute_dtype=jnp.bfloat16):
    """Cast Linear params to the MXU compute dtype once and zero-pad the hidden
    dim to a multiple of 128 (zero cols/rows contribute exactly 0 to the output).
    w1: (D, H), b1: (H,), w2: (H, D), b2: (D,)."""
    D, H = w1.shape
    Hp = _round_up(H, 128)
    pad = Hp - H
    w1c = jnp.pad(w1.astype(compute_dtype), ((0, 0), (0, pad)))
    w2c = jnp.pad(w2.astype(compute_dtype), ((0, pad), (0, 0)))
    b1c = jnp.pad(b1.astype(jnp.float32), (0, pad)).reshape(1, Hp)
    b2c = b2.astype(jnp.float32).reshape(1, D)
    return (w1c, b1c, w2c, b2c)


@functools.partial(
    jax.jit, static_argnames=("tm", "h_chunk", "approximate_gelu", "force_stream"))
def mlp_block(x, params, *, tm=None, h_chunk=None, approximate_gelu=False,
              force_stream=False):
    """x: (..., D).  params: output of prepare_mlp_params."""
    w1c, b1c, w2c, b2c = params
    orig_dtype = x.dtype
    *lead, D = x.shape
    Dw, Hp = w1c.shape
    assert D == Dw, (D, Dw)
    M = int(math.prod(lead)) if lead else 1
    x2d = x.reshape(M, D)

    c_bytes = jnp.dtype(w1c.dtype).itemsize
    x_bytes = jnp.dtype(x2d.dtype).itemsize
    o_bytes = jnp.dtype(orig_dtype).itemsize

    # Per-generation VMEM budget (leave pipeline headroom).
    cap = _vmem_capacity_bytes()
    budget = (104 << 20) if cap >= (96 << 20) else (52 << 20)

    # Row tile: large on the 128 MiB parts, 256 on v7x; always a multiple of 16.
    if tm is None:
        tm = 512 if cap >= (96 << 20) else 256
    tm_eff = min(_round_up(tm, 16), _round_up(M, 16))
    # Give v7x's two TensorCores ("parallel" row axis) at least two row tiles.
    if M > 256 and _cdiv(M, tm_eff) < 2:
        tm_eff = _round_up(_cdiv(M, 2), 16)

    # Hidden-dim chunk (multiple of 128 that divides the padded Hp).
    tH = _pick_h_chunk(Hp) if h_chunk is None else int(h_chunk)
    assert Hp % tH == 0 and (tH % 128 == 0 or tH == Hp), (Hp, tH)
    n_chunks = Hp // tH

    def _tiles_and_work(tmv, tHv):
        tiles = 2 * tmv * D * (x_bytes + o_bytes)            # double-buffered x / out
        work = tmv * D * 4 + 2 * tmv * tHv * (4 + c_bytes)   # f32 acc + chunk temps
        return tiles + work

    # Resident footprint with SINGLE-buffered weights/biases.
    res_est = 2 * D * Hp * c_bytes + (Hp + D) * 4 + _tiles_and_work(tm_eff, tH)
    use_stream = bool(force_stream) or (res_est > budget)

    if not use_stream:
        est = res_est
        grid = (_cdiv(M, tm_eff),)
        kernel = functools.partial(_mlp_resident_kernel, h_chunk=tH,
                                   n_chunks=n_chunks, approximate=approximate_gelu)
        # Constant block index -> resident; single-buffer to halve VMEM footprint.
        in_specs = [
            pl.BlockSpec((tm_eff, D), lambda i: (i, 0)),
            pl.BlockSpec((D, Hp), lambda i: (0, 0), pipeline_mode=pl.Buffered(1)),
            pl.BlockSpec((1, Hp), lambda i: (0, 0), pipeline_mode=pl.Buffered(1)),
            pl.BlockSpec((Hp, D), lambda i: (0, 0), pipeline_mode=pl.Buffered(1)),
            pl.BlockSpec((1, D), lambda i: (0, 0), pipeline_mode=pl.Buffered(1)),
        ]
        out_specs = pl.BlockSpec((tm_eff, D), lambda i: (i, 0))
        scratch_shapes = []
        dim_sem = ("parallel",)
    else:
        # Weight-streaming fallback: VMEM is O(D*tH), so any mlp_dim fits v7x.
        def _stream_est(tmv, tHv):
            return (2 * (2 * D * tHv * c_bytes + tHv * 4) + D * 4
                    + _tiles_and_work(tmv, tHv))
        while _stream_est(tm_eff, tH) > budget and tm_eff > 128:
            tm_eff = max(128, _round_up(tm_eff // 2, 16))
        est = _stream_est(tm_eff, tH)
        grid = (_cdiv(M, tm_eff), n_chunks)
        kernel = functools.partial(_mlp_stream_kernel, approximate=approximate_gelu)
        in_specs = [
            pl.BlockSpec((tm_eff, D), lambda i, h: (i, 0)),
            pl.BlockSpec((D, tH), lambda i, h: (0, h)),
            pl.BlockSpec((1, tH), lambda i, h: (0, h)),
            pl.BlockSpec((tH, D), lambda i, h: (h, 0)),
            pl.BlockSpec((1, D), lambda i, h: (0, 0), pipeline_mode=pl.Buffered(1)),
        ]
        out_specs = pl.BlockSpec((tm_eff, D), lambda i, h: (i, 0))
        scratch_shapes = [pltpu.VMEM((tm_eff, D), jnp.float32)]
        dim_sem = ("parallel", "arbitrary")

    vmem_limit = int(min(max(est + (8 << 20), 32 << 20), budget))

    out2d = pl.pallas_call(
        kernel,
        out_shape=jax.ShapeDtypeStruct((M, D), orig_dtype),
        grid_spec=pltpu.PrefetchScalarGridSpec(
            num_scalar_prefetch=0,
            grid=grid,
            in_specs=in_specs,
            out_specs=out_specs,
            scratch_shapes=scratch_shapes,
        ),
        compiler_params=pltpu.CompilerParams(
            dimension_semantics=dim_sem,
            vmem_limit_bytes=vmem_limit,
        ),
    )(x2d, w1c, b1c, w2c, b2c)

    return out2d.reshape(*lead, D)


def _reference(x, w1, b1, w2, b2):
    h = x @ w1 + b1
    h = 0.5 * h * (1.0 + lax.erf(h * jnp.float32(_INV_SQRT2)))
    return h @ w2 + b2


if __name__ == "__main__":
    key = jax.random.PRNGKey(0)

    # --- Test 1: tiny shapes, resident-weight path, single H chunk ----------
    B, N, D, H = 2, 8, 32, 64  # batch, tokens, embedding_dim, mlp_dim
    kx, k1, k2, k3, k4, k5 = jax.random.split(key, 6)
    x = jax.random.normal(kx, (B, N, D), dtype=jnp.float32)
    w1 = jax.random.normal(k1, (D, H), dtype=jnp.float32) * (1.0 / math.sqrt(D))
    b1 = jax.random.normal(k2, (H,), dtype=jnp.float32) * 0.01
    w2 = jax.random.normal(k3, (H, D), dtype=jnp.float32) * (1.0 / math.sqrt(H))
    b2 = jax.random.normal(k4, (D,), dtype=jnp.float32) * 0.01

    params = prepare_mlp_params(w1, b1, w2, b2)           # one-time cast + pad
    out = mlp_block(x, params)
    jax.block_until_ready(out)
    ref = _reference(x, w1, b1, w2, b2)
    assert out.shape == (B, N, D)
    # bf16 matmul operands (f32 accumulation) -> loosened tolerance vs f32 ref.
    assert jnp.allclose(out, ref, atol=5e-2, rtol=5e-2), (
        float(jnp.max(jnp.abs(out - ref))))

    # --- Test 2: ragged rows, multi row-tile, in-kernel H chunking ----------
    B2, N2, D2, H2 = 2, 300, 128, 256
    kx2, k6, k7, k8, k9 = jax.random.split(k5, 5)
    x2 = jax.random.normal(kx2, (B2, N2, D2), dtype=jnp.float32)
    w1b = jax.random.normal(k6, (D2, H2), dtype=jnp.float32) * (1.0 / math.sqrt(D2))
    b1b = jax.random.normal(k7, (H2,), dtype=jnp.float32) * 0.01
    w2b = jax.random.normal(k8, (H2, D2), dtype=jnp.float32) * (1.0 / math.sqrt(H2))
    b2b = jax.random.normal(k9, (D2,), dtype=jnp.float32) * 0.01

    params2 = prepare_mlp_params(w1b, b1b, w2b, b2b)
    out2 = mlp_block(x2, params2, h_chunk=128)            # 2 in-kernel H chunks
    jax.block_until_ready(out2)
    ref2 = _reference(x2, w1b, b1b, w2b, b2b)
    assert out2.shape == (B2, N2, D2)
    assert jnp.allclose(out2, ref2, atol=5e-2, rtol=5e-2), (
        float(jnp.max(jnp.abs(out2 - ref2))))

    # --- Test 3: H-streaming path (large-mlp_dim / v7x fallback), forced ----
    out3 = mlp_block(x2, params2, h_chunk=128, force_stream=True)
    jax.block_until_ready(out3)
    assert out3.shape == (B2, N2, D2)
    assert jnp.allclose(out3, ref2, atol=5e-2, rtol=5e-2), (
        float(jnp.max(jnp.abs(out3 - ref2))))

    print("KERNEL_OK")
</pallas_src>

<mosaic_0001>
module attributes {stable_mosaic.version = 11 : i64} {
  func.func @_mlp_resident_kernel(%arg0: i32, %arg1: memref<16x32xf32, #tpu.memory_space<vmem>>, %arg2: memref<32x128xbf16, #tpu.memory_space<vmem>>, %arg3: memref<1x128xf32, #tpu.memory_space<vmem>>, %arg4: memref<128x32xbf16, #tpu.memory_space<vmem>>, %arg5: memref<1x32xf32, #tpu.memory_space<vmem>>, %arg6: memref<16x32xf32, #tpu.memory_space<vmem>>) attributes {dimension_semantics = [#tpu.dimension_semantics<parallel>], iteration_bounds = array<i64: 1>, scalar_prefetch = 0 : i64, scratch_operands = 0 : i64, tpu.core_type = #tpu.core_type<tc>, window_params = [{transform_indices = @transform_0, window_bounds = array<i64: 16, 32>}, {pipeline_mode = #tpu.pipeline_mode<synchronous>, transform_indices = @transform_1, window_bounds = array<i64: 32, 128>}, {pipeline_mode = #tpu.pipeline_mode<synchronous>, transform_indices = @transform_2, window_bounds = array<i64: 1, 128>}, {pipeline_mode = #tpu.pipeline_mode<synchronous>, transform_indices = @transform_3, window_bounds = array<i64: 128, 32>}, {pipeline_mode = #tpu.pipeline_mode<synchronous>, transform_indices = @transform_4, window_bounds = array<i64: 1, 32>}, {transform_indices = @transform_5, window_bounds = array<i64: 16, 32>}]} {
    %c0 = arith.constant 0 : index
    %c0_0 = arith.constant 0 : index
    %0 = vector.load %arg1[%c0, %c0_0] : memref<16x32xf32, #tpu.memory_space<vmem>>, vector<16x32xf32>
    %1 = arith.truncf %0 : vector<16x32xf32> to vector<16x32xbf16>
    %cst = arith.constant 0.000000e+00 : f32
    %2 = vector.broadcast %cst : f32 to vector<16x32xf32>
    %c0_1 = arith.constant 0 : index
    %c0_2 = arith.constant 0 : index
    %3 = vector.load %arg2[%c0_1, %c0_2] : memref<32x128xbf16, #tpu.memory_space<vmem>>, vector<32x128xbf16>
    %cst_3 = arith.constant dense<0.000000e+00> : vector<16x128xf32>
    %4 = tpu.matmul %1, %3, %cst_3 {dimension_numbers = #tpu.dot_dimension_numbers<[1], [0], [0], [1], [0, 0, 1, 1], [], []>} : vector<16x32xbf16>, vector<32x128xbf16>, vector<16x128xf32> -> vector<16x128xf32>
    %c0_4 = arith.constant 0 : index
    %c0_5 = arith.constant 0 : index
    %5 = vector.load %arg3[%c0_4, %c0_5] : memref<1x128xf32, #tpu.memory_space<vmem>>, vector<1x128xf32>
    %6 = vector.broadcast %5 : vector<1x128xf32> to vector<16x128xf32>
    %7 = arith.addf %4, %6 : vector<16x128xf32>
    %cst_6 = arith.constant 5.000000e-01 : f32
    %8 = vector.broadcast %cst_6 : f32 to vector<16x128xf32>
    %9 = arith.mulf %8, %7 : vector<16x128xf32>
    %cst_7 = arith.constant 0.707106769 : f32
    %10 = vector.broadcast %cst_7 : f32 to vector<16x128xf32>
    %11 = arith.mulf %7, %10 : vector<16x128xf32>
    %12 = math.erf %11 : vector<16x128xf32>
    %cst_8 = arith.constant 1.000000e+00 : f32
    %13 = vector.broadcast %cst_8 : f32 to vector<16x128xf32>
    %14 = arith.addf %13, %12 : vector<16x128xf32>
    %15 = arith.mulf %9, %14 : vector<16x128xf32>
    %16 = arith.truncf %15 : vector<16x128xf32> to vector<16x128xbf16>
    %c0_9 = arith.constant 0 : index
    %c0_10 = arith.constant 0 : index
    %17 = vector.load %arg4[%c0_9, %c0_10] : memref<128x32xbf16, #tpu.memory_space<vmem>>, vector<128x32xbf16>
    %cst_11 = arith.constant dense<0.000000e+00> : vector<16x32xf32>
    %18 = tpu.matmul %16, %17, %cst_11 {dimension_numbers = #tpu.dot_dimension_numbers<[1], [0], [0], [1], [0, 0, 1, 1], [], []>} : vector<16x128xbf16>, vector<128x32xbf16>, vector<16x32xf32> -> vector<16x32xf32>
    %19 = arith.addf %2, %18 : vector<16x32xf32>
    %c0_12 = arith.constant 0 : index
    %c0_13 = arith.constant 0 : index
    %20 = vector.load %arg5[%c0_12, %c0_13] : memref<1x32xf32, #tpu.memory_space<vmem>>, vector<1x32xf32>
    %21 = vector.broadcast %20 : vector<1x32xf32> to vector<16x32xf32>
    %22 = arith.addf %19, %21 : vector<16x32xf32>
    %c0_14 = arith.constant 0 : index
    %c0_15 = arith.constant 0 : index
    %23 = vector.load %arg6[%c0_14, %c0_15] : memref<16x32xf32, #tpu.memory_space<vmem>>, vector<16x32xf32>
    tpu.vector_store %arg6[%c0_14, %c0_15], %22 {strides = array<i32>} : memref<16x32xf32, #tpu.memory_space<vmem>>, vector<16x32xf32>,
    return
  }
  func.func @transform_0(%arg0: i32) -> (i32, i32) {
    %c0_i32 = arith.constant 0 : i32
    %c0_i32_0 = arith.constant 0 : i32
    return %arg0, %c0_i32 : i32, i32
  }
  func.func @transform_1(%arg0: i32) -> (i32, i32) {
    %c0_i32 = arith.constant 0 : i32
    %c0_i32_0 = arith.constant 0 : i32
    %c0_i32_1 = arith.constant 0 : i32
    return %c0_i32, %c0_i32_0 : i32, i32
  }
  func.func @transform_2(%arg0: i32) -> (i32, i32) {
    %c0_i32 = arith.constant 0 : i32
    %c0_i32_0 = arith.constant 0 : i32
    %c0_i32_1 = arith.constant 0 : i32
    return %c0_i32, %c0_i32_0 : i32, i32
  }
  func.func @transform_3(%arg0: i32) -> (i32, i32) {
    %c0_i32 = arith.constant 0 : i32
    %c0_i32_0 = arith.constant 0 : i32
    %c0_i32_1 = arith.constant 0 : i32
    return %c0_i32, %c0_i32_0 : i32, i32
  }
  func.func @transform_4(%arg0: i32) -> (i32, i32) {
    %c0_i32 = arith.constant 0 : i32
    %c0_i32_0 = arith.constant 0 : i32
    %c0_i32_1 = arith.constant 0 : i32
    return %c0_i32, %c0_i32_0 : i32, i32
  }
  func.func @transform_5(%arg0: i32) -> (i32, i32) {
    %c0_i32 = arith.constant 0 : i32
    %c0_i32_0 = arith.constant 0 : i32
    return %arg0, %c0_i32 : i32, i32
  }
}

</mosaic_0001>

<llo_original>
// kernel: mlp_block.1
$region0: #{mlp_block.1}
  #allocation0 [shape = 'u32[]', space=smem, size = 0x4, offset = 0x4, fixed_abs, tag = 'smem constant byte address 0x4 - core index']
  #allocation1 [shape = 'u32[72,128]{1,0:T(1,128)}', space=vmem, size = 0x9000, scoped, tag = 'internal scratch']
  %s0 = inlined_call_operand.vmem [shape: f32[16,32], index: 0, kind: input, shape index: {}]
  %s1 = inlined_call_operand.vmem [shape: bf16[32,128], index: 1, kind: input, shape index: {}]
  %s2 = inlined_call_operand.vmem [shape: f32[1,128], index: 2, kind: input, shape index: {}]
  %s3 = inlined_call_operand.vmem [shape: bf16[128,32], index: 3, kind: input, shape index: {}]
  %s4 = inlined_call_operand.vmem [shape: f32[1,32], index: 4, kind: input, shape index: {}]
  %s5 = inlined_call_operand.hbm [shape: f32[16,32], index: 5, kind: output, shape index: {}]
  %s6 = sld [smem:[#allocation0]]
  $region30: #{mlp_block.1} parent=0
    _
  %s8 = ssub.s32 1, %s6
  %s9 = scalar_select 0, %s8, %s6
  $region1: #{mlp_block.1} parent=0
    #allocation2 [shape = 'u8[8192]{0}', space=vmem, size = 0x2000, scoped, tag = 'output window, operand 0, single buffered']
    #allocation3 [shape = 's32[1]{0}', space=sflag, size = 0x4, scoped, tag = 'scoped memory for mlp_block.1']
    %10 = vsyncpa [#allocation3], 0
    // Predicated region
    $region2: #{mlp_block.1} parent=1 // pred_check
      _
    $region3: #{mlp_block.1} parent=1 // pred_check_branch
      %12 = sbr.rel (0) target = $region5
    $region4: #{mlp_block.1} parent=1 // pred_region
      _
    $region5: #{mlp_block.1} parent=1 // pred_fallthru
      _
    // Predicated region
    $region6: #{mlp_block.1} parent=1 // pred_check
      _
    $region7: #{mlp_block.1} parent=1 // pred_check_branch
      %14 = sbr.rel (0) target = $region9
    $region8: #{mlp_block.1} parent=1 // pred_region
      _
    $region9: #{mlp_block.1} parent=1 // pred_fallthru
      _
    // Predicated region
    $region10: #{mlp_block.1} parent=1 // pred_check
      _
    $region11: #{mlp_block.1} parent=1 // pred_check_branch
      %16 = sbr.rel (0) target = $region13
    $region12: #{mlp_block.1} parent=1 // pred_region
      _
    $region13: #{mlp_block.1} parent=1 // pred_fallthru
      _
    // Predicated region
    $region14: #{mlp_block.1} parent=1 // pred_check
      _
    $region15: #{mlp_block.1} parent=1 // pred_check_branch
      %18 = sbr.rel (0) target = $region17
    $region16: #{mlp_block.1} parent=1 // pred_region
      _
    $region17: #{mlp_block.1} parent=1 // pred_fallthru
      _
    // Predicated region
    $region18: #{mlp_block.1} parent=1 // pred_check
      _
    $region19: #{mlp_block.1} parent=1 // pred_check_branch
      %20 = sbr.rel (0) target = $region21
    $region20: #{mlp_block.1} parent=1 // pred_region
      _
    $region21: #{mlp_block.1} parent=1 // pred_fallthru
      _
    %v22 = vld [vmem:[%s0] sm:$0xff]
    %v23 = vld [vmem:[%s0 + $0x8] sm:$0xff]
    %v24 = vpack.c.bf16 %v23, %v22
    %v25 = vld [vmem:[%s1] sm:$0xf]
    %v26 = vld [vmem:[%s1 + $0x4] sm:$0xf]
    %v27 = vld [vmem:[%s1 + $0x8] sm:$0xf]
    %v28 = vld [vmem:[%s1 + $0xc] sm:$0xf]
    %v29 = vld [vmem:[%s2] sm:$0x1]
    %v31 = vperm.slane %v29, 0
    %v37 = vunpack.c.l.b16 %v25
    %v38 = vunpack.c.l.b16 %v26
    %v39 = vunpack.c.l.b16 %v27
    %v40 = vunpack.c.l.b16 %v28
    %v41 = vpack.c.b16 %v38, %v37
    %v42 = vpack.c.b16 %v40, %v39
    %vm45 = vcmask 261120
    %v47 = vsel %vm45, %v24, 0
    %49 = vmatpush.bf16.msra.mxu0 0
    %50 = vmatpush.bf16.msra.mxu0 0
    %51 = vmatpush.bf16.msra.mxu0 0
    %52 = vmatpush.bf16.msra.mxu0 0
    %53 = vmatpush.bf16.msra.mxu0 0
    %54 = vmatpush.bf16.msra.mxu0 0
    %55 = vmatpush.bf16.msra.mxu0 %v42
    %56 = vmatpush.bf16.msra.mxu0 %v41
    %57 = vmatmul.bf16.gmra.mxu0 %v47
    %v58 = vpop.f32.mrf.mxu0
    %v59 = vadd.f32 %v31, %v58
    %v60 = vpop.f32.mrf.mxu0
    %v61 = vadd.f32 %v31, %v60
    %62 = vdwg.mxu0
    %v63 = vmul.f32 %v59, 0.5
    %v64 = vmul.f32 %v61, 0.5
    %v65 = vmul.f32 %v59, 0.70710677
    %v66 = vmul.f32 %v61, 0.70710677
    %v67 = vmul.f32 %v65, %v65
    %v68 = vmin.f32 16.0, %v67
    %v69 = vmul.f32 %v68, 2.1237322e-06
    %v70 = vadd.f32 %v69, 0.00028619796
    %v71 = vmul.f32 %v68, %v70
    %v72 = vadd.f32 %v71, 0.0036580483
    %v73 = vmul.f32 %v68, %v72
    %v74 = vadd.f32 %v73, 0.05243302
    %v75 = vmul.f32 %v68, %v74
    %v76 = vadd.f32 %v75, 0.18741608
    %v77 = vmul.f32 %v68, %v76
    %v78 = vadd.f32 %v77, 1.1283791
    %v79 = vmul.f32 %v65, %v78
    %v80 = vmul.f32 %v68, 3.8918573e-05
    %v81 = vadd.f32 %v80, 0.001143296
    %v82 = vmul.f32 %v68, %v81
    %v83 = vadd.f32 %v82, 0.014752088
    %v84 = vmul.f32 %v68, %v83
    %v85 = vadd.f32 %v84, 0.112945676
    %v86 = vmul.f32 %v68, %v85
    %v87 = vadd.f32 %v86, 0.4994258
    %v88 = vmul.f32 %v68, %v87
    %v89 = vadd.f32 %v88, 1.0
    %v90 = vrcp.pop %v89
    %v91 = vmul.f32 %v89, %v90
    %v92 = vsub.f32 1.0, %v91
    %v93 = vmul.f32 %v90, %v92
    %v94 = vadd.f32 %v90, %v93
    %vm95 = vweird.f32 %v89
    %vm96 = vweird.f32 %v90
    %vm97 = vmor %vm95, %vm96
    %v98 = vsel %vm97, %v90, %v94
    %v99 = vand.u32 2147483647, %v89
    %vm100 = vcmp.eq.f32.partialorder %v99, 8.507059e+37
    %v101 = vand.u32 %v89, 2147483648
    %v102 = vor.u32 1.1754944e-38, %v101
    %v103 = vsel %vm100, %v102, %v98
    %v104 = vmul.f32 %v79, %v103
    %v105 = vmin.f32 %v104, 1.0
    %v106 = vmax.f32 %v105, -1.0
    %v107 = vmul.f32 %v66, %v66
    %v108 = vmin.f32 16.0, %v107
    %v109 = vmul.f32 %v108, 2.1237322e-06
    %v110 = vadd.f32 %v109, 0.00028619796
    %v111 = vmul.f32 %v108, %v110
    %v112 = vadd.f32 %v111, 0.0036580483
    %v113 = vmul.f32 %v108, %v112
    %v114 = vadd.f32 %v113, 0.05243302
    %v115 = vmul.f32 %v108, %v114
    %v116 = vadd.f32 %v115, 0.18741608
    %v117 = vmul.f32 %v108, %v116
    %v118 = vadd.f32 %v117, 1.1283791
    %v119 = vmul.f32 %v66, %v118
    %v120 = vmul.f32 %v108, 3.8918573e-05
    %v121 = vadd.f32 %v120, 0.001143296
    %v122 = vmul.f32 %v108, %v121
    %v123 = vadd.f32 %v122, 0.014752088
    %v124 = vmul.f32 %v108, %v123
    %v125 = vadd.f32 %v124, 0.112945676
    %v126 = vmul.f32 %v108, %v125
    %v127 = vadd.f32 %v126, 0.4994258
    %v128 = vmul.f32 %v108, %v127
    %v129 = vadd.f32 %v128, 1.0
    %v130 = vrcp.pop %v129
    %v131 = vmul.f32 %v129, %v130
    %v132 = vsub.f32 1.0, %v131
    %v133 = vmul.f32 %v130, %v132
    %v134 = vadd.f32 %v130, %v133
    %vm135 = vweird.f32 %v129
    %vm136 = vweird.f32 %v130
    %vm137 = vmor %vm135, %vm136
    %v138 = vsel %vm137, %v130, %v134
    %v139 = vand.u32 2147483647, %v129
    %vm140 = vcmp.eq.f32.partialorder %v139, 8.507059e+37
    %v141 = vand.u32 %v129, 2147483648
    %v142 = vor.u32 1.1754944e-38, %v141
    %v143 = vsel %vm140, %v142, %v138
    %v144 = vmul.f32 %v119, %v143
    %v145 = vmin.f32 %v144, 1.0
    %v146 = vmax.f32 %v145, -1.0
    %v147 = vadd.f32 %v106, 1.0
    %v148 = vadd.f32 %v146, 1.0
    %v149 = vmul.f32 %v63, %v147
    %v150 = vmul.f32 %v64, %v148
    %v151 = vpack.c.bf16 %v150, %v149
    %v152 = vld [vmem:[%s3] sm:$0xf]
    %v153 = vld [vmem:[%s3 + $0x4] sm:$0xf]
    %v154 = vld [vmem:[%s3 + $0x8] sm:$0xf]
    %v155 = vld [vmem:[%s3 + $0xc] sm:$0xf]
    %v156 = vld [vmem:[%s3 + $0x10] sm:$0xf]
    %v157 = vld [vmem:[%s3 + $0x14] sm:$0xf]
    %v158 = vld [vmem:[%s3 + $0x18] sm:$0xf]
    %v159 = vld [vmem:[%s3 + $0x1c] sm:$0xf]
    %v160 = vld [vmem:[%s3 + $0x20] sm:$0xf]
    %v161 = vld [vmem:[%s3 + $0x24] sm:$0xf]
    %v162 = vld [vmem:[%s3 + $0x28] sm:$0xf]
    %v163 = vld [vmem:[%s3 + $0x2c] sm:$0xf]
    %v164 = vld [vmem:[%s3 + $0x30] sm:$0xf]
    %v165 = vld [vmem:[%s3 + $0x34] sm:$0xf]
    %v166 = vld [vmem:[%s3 + $0x38] sm:$0xf]
    %v167 = vld [vmem:[%s3 + $0x3c] sm:$0xf]
    %v168 = vld [vmem:[%s4] sm:$0x1]
    %v170 = vperm.slane %v168, 0
    %v188 = vunpack.c.l.b16 %v152
    %v189 = vunpack.c.l.b16 %v153
    %v190 = vunpack.c.l.b16 %v154
    %v191 = vunpack.c.l.b16 %v155
    %v192 = vunpack.c.l.b16 %v156
    %v193 = vunpack.c.l.b16 %v157
    %v194 = vunpack.c.l.b16 %v158
    %v195 = vunpack.c.l.b16 %v159
    %v196 = vunpack.c.l.b16 %v160
    %v197 = vunpack.c.l.b16 %v161
    %v198 = vunpack.c.l.b16 %v162
    %v199 = vunpack.c.l.b16 %v163
    %v200 = vunpack.c.l.b16 %v164
    %v201 = vunpack.c.l.b16 %v165
    %v202 = vunpack.c.l.b16 %v166
    %v203 = vunpack.c.l.b16 %v167
    %v204 = vpack.c.b16 %v189, %v188
    %v205 = vpack.c.b16 %v191, %v190
    %v206 = vpack.c.b16 %v193, %v192
    %v207 = vpack.c.b16 %v195, %v194
    %v208 = vpack.c.b16 %v197, %v196
    %v209 = vpack.c.b16 %v199, %v198
    %v210 = vpack.c.b16 %v201, %v200
    %v211 = vpack.c.b16 %v203, %v202
    %220 = vmatpush.bf16.msra.mxu0 %v211
    %221 = vmatpush.bf16.msra.mxu0 %v210
    %222 = vmatpush.bf16.msra.mxu0 %v209
    %223 = vmatpush.bf16.msra.mxu0 %v208
    %224 = vmatpush.bf16.msra.mxu0 %v207
    %225 = vmatpush.bf16.msra.mxu0 %v206
    %226 = vmatpush.bf16.msra.mxu0 %v205
    %227 = vmatpush.bf16.msra.mxu0 %v204
    %228 = vmatmul.bf16.gmra.mxu0 %v151
    %v229 = vpop.f32.mrf.mxu0
    %v230 = vadd.f32 %v170, %v229
    %v231 = vpop.f32.mrf.mxu0
    %v232 = vadd.f32 %v170, %v231
    %233 = vdwg.mxu0
    %234 = vst.msk [vmem:[#allocation2] sm:$0xff] %vm45, %v230
    %235 = vst.msk [vmem:[#allocation2 + $0x8] sm:$0xff] %vm45, %v232
    // Predicated region
    $region22: #{mlp_block.1} parent=1 // pred_check
      _
    $region23: #{mlp_block.1} parent=1 // pred_check_branch
      %237 = sbr.rel (0) target = $region25
    $region24: #{mlp_block.1} parent=1 // pred_region
      %239 = vsyncadd [#allocation3], 0
      %s240 = sshll.u32 [#allocation2], 4
      %s241 = int_to_ptr.vmem [resolvable:$true] %s240
      %s242 = sshll.u32 %s5, 4
      %s243 = int_to_ptr.hbm [resolvable:$true] %s242
      %248 = dma.vmem_to_hbm [thread:$0]  %s241, 256, %s243, [#allocation3], 128, 128, 8
    $region25: #{mlp_block.1} parent=1 // pred_fallthru
      _
    // Predicated region
    $region26: #{mlp_block.1} parent=1 // pred_check
      _
    $region27: #{mlp_block.1} parent=1 // pred_check_branch
      %250 = sbr.rel (0) target = $region29
    $region28: #{mlp_block.1} parent=1 // pred_region
      %252 = dma.done [#allocation3], 256
    $region29: #{mlp_block.1} parent=1 // pred_fallthru
      _
    %253 = vsyncpa [#allocation3], 1

</llo_original>
